<compile_context>
chip_gen: v6e
topology: v6e:2x2x1
jax: 0.10.0
libtpu: 0.0.40
codegen_flags: <defaults>
</compile_context>

<pallas_src>
import math

import jax
import jax.numpy as jnp
from jax.experimental import pallas as pl
from jax.experimental.pallas import tpu as pltpu


# ----------------------------- model sizes -------------------------------- #

VOCAB = 64
SEQ = 8          # fixed sequence length (incl. leading [CLS]-like token)
HIDDEN = 32      # logical hidden size
FFN = 64         # logical FFN size
DP = 128         # lane-padded width (full vreg lane dimension)

# rows of the packed bias / LayerNorm / lane-mask slab
(_BQ, _BK, _BV, _BO, _B1, _B2, _G1, _BE1, _G2, _BE2, _LMASK) = range(11)
B_ROWS = 16      # padded up to a multiple of 8 sublanes

NEG_INF = -1e30

_KNOWN_KEYS = {"bert", "gpt", "gpt_2", "ctrl", "tr_xl", "xlnet", "xlm",
               "dis_bert", "roberta", "xlm_rob"}


# ----------------------------- Pallas kernel ------------------------------ #

def _layernorm_padded(x, gamma, beta, lane_mask, n_valid, eps=1e-12):
    """LayerNorm over the first `n_valid` lanes of a lane-padded [S, DP] tile.

    Padded lanes of `x` are exactly zero, so the lane sum equals the sum over
    the real lanes.  Two-pass variance: (x - mu) is masked to the valid lanes
    before squaring, so it is always >= 0 (no rsqrt(negative) risk).
    gamma/beta are zero in padded lanes, so the output padding stays zero.
    """
    inv_n = 1.0 / n_valid
    mu = jnp.sum(x, axis=-1, keepdims=True) * inv_n
    d = (x - mu) * lane_mask
    var = jnp.sum(d * d, axis=-1, keepdims=True) * inv_n
    return d * jax.lax.rsqrt(var + eps) * gamma + beta


def _gelu(x):
    # TODO(synk): HF BERT uses the exact erf GELU; the tanh approximation is
    # kept for a guaranteed EUP lowering (gelu(0)==0, so padded lanes stay 0).
    c = math.sqrt(2.0 / math.pi)
    return 0.5 * x * (1.0 + jnp.tanh(c * (x + 0.044715 * x * x * x)))


def encoder_kernel(ids_ref, mask_ref, tok_ref, pos_ref, w_ref, b_ref,
                   out_ref, x_scratch):
    """Embedding gather + one BERT-style block; one grid step per sequence.

    ids_ref  : [B, SEQ]      i32   SMEM (scalar prefetch)  token ids
    mask_ref : [1, 1, DP]    f32   additive key mask (0 / -1e30), this batch row
    tok_ref  : [VOCAB, DP]   f32   lane-padded token embedding table
    pos_ref  : [SEQ, DP]     f32   lane-padded position embeddings
    w_ref    : [DP, 6*DP]    bf16  packed weights [wq*scale | wk | wv | wo | w1 | w2]
    b_ref    : [B_ROWS, DP]  f32   packed biases / LN params / lane-validity mask
    out_ref  : [1, SEQ, DP]  f32
    x_scratch: [SEQ, DP]     f32   gather staging buffer
    """
    b = pl.program_id(0)

    # ---- in-kernel embedding gather (unrolled SEQ dynamic row reads) ----
    for s in range(SEQ):
        tid = ids_ref[b, s]
        x_scratch[s:s + 1, :] = tok_ref[pl.ds(tid, 1), :]
    x = x_scratch[...] + pos_ref[...]                             # [S, DP] f32

    lane_mask = b_ref[_LMASK:_LMASK + 1, :]                       # [1, DP]

    # ---- fused QKV projection: bf16 MXU inputs, f32 accumulation ----
    x16 = x.astype(jnp.bfloat16)
    qkv = jnp.dot(x16, w_ref[:, 0:3 * DP],
                  preferred_element_type=jnp.float32)             # [S, 3*DP]
    q = qkv[:, 0 * DP:1 * DP] + b_ref[_BQ:_BQ + 1, :]             # scale folded in
    k = qkv[:, 1 * DP:2 * DP] + b_ref[_BK:_BK + 1, :]
    v = qkv[:, 2 * DP:3 * DP] + b_ref[_BV:_BV + 1, :]

    # ---- attention scores: contract last axes, no XLU transpose of k ----
    scores = jax.lax.dot_general(
        q, k, dimension_numbers=(((1,), (1,)), ((), ())),
        preferred_element_type=jnp.float32)                       # [S, S]

    # additive key-side padding mask (built on the host)
    scores = scores + mask_ref[0][:, 0:SEQ]                       # [1,S] bcast

    # ---- row-wise softmax (reciprocal on the EUP slot) ----
    m = jnp.max(scores, axis=-1, keepdims=True)
    e = jnp.exp(scores - m)
    p = e * pl.reciprocal(jnp.sum(e, axis=-1, keepdims=True), approx=True)

    attn = jnp.dot(p, v, preferred_element_type=jnp.float32)      # [S, DP] f32
    attn = jnp.dot(attn.astype(jnp.bfloat16), w_ref[:, 3 * DP:4 * DP],
                   preferred_element_type=jnp.float32) + b_ref[_BO:_BO + 1, :]

    # ---- residual + layernorm 1 (f32 VPU math) ----
    h1 = _layernorm_padded(x + attn,
                           b_ref[_G1:_G1 + 1, :], b_ref[_BE1:_BE1 + 1, :],
                           lane_mask, HIDDEN)

    # ---- feed-forward ----
    f = jnp.dot(h1.astype(jnp.bfloat16), w_ref[:, 4 * DP:5 * DP],
                preferred_element_type=jnp.float32) + b_ref[_B1:_B1 + 1, :]
    f = _gelu(f)
    f = jnp.dot(f.astype(jnp.bfloat16), w_ref[:, 5 * DP:6 * DP],
                preferred_element_type=jnp.float32) + b_ref[_B2:_B2 + 1, :]

    # ---- residual + layernorm 2 (lane-dense, unmasked store) ----
    out_ref[0, :, :] = _layernorm_padded(
        h1 + f, b_ref[_G2:_G2 + 1, :], b_ref[_BE2:_BE2 + 1, :],
        lane_mask, HIDDEN)


@jax.jit
def _encode_batch(ids, masks, tok_emb_p, pos_emb_p, w_slab, b_slab):
    """ids: [B,SEQ] i32, masks: [B,1,DP] f32.  Returns [B, SEQ, HIDDEN] f32."""
    batch = ids.shape[0]
    hidden = pl.pallas_call(
        encoder_kernel,
        out_shape=jax.ShapeDtypeStruct((batch, SEQ, DP), jnp.float32),
        grid_spec=pltpu.PrefetchScalarGridSpec(
            num_scalar_prefetch=1,                 # ids -> SMEM
            grid=(batch,),
            in_specs=[
                pl.BlockSpec((1, 1, DP), lambda b, _ids: (b, 0, 0)),     # mask
                pl.BlockSpec((VOCAB, DP), lambda b, _ids: (0, 0)),       # tok table
                pl.BlockSpec((SEQ, DP), lambda b, _ids: (0, 0)),         # pos table
                pl.BlockSpec((DP, 6 * DP), lambda b, _ids: (0, 0)),      # weights (bf16)
                pl.BlockSpec((B_ROWS, DP), lambda b, _ids: (0, 0)),      # biases / LN
            ],
            out_specs=pl.BlockSpec((1, SEQ, DP), lambda b, _ids: (b, 0, 0)),
            scratch_shapes=[pltpu.VMEM((SEQ, DP), jnp.float32)],
        ),
        compiler_params=pltpu.CompilerParams(
            dimension_semantics=("parallel",)),    # v7x: 2 TCs split the batch
    )(ids, masks, tok_emb_p, pos_emb_p, w_slab, b_slab)
    return hidden[:, :, :HIDDEN]                   # un-pad lanes (fused in jit)


# ------------------------- synthetic "language model" --------------------- #

def init_params(key):
    ks = jax.random.split(key, 8)
    s = 0.02
    return {
        "tok_emb": s * jax.random.normal(ks[0], (VOCAB, HIDDEN), jnp.float32),
        "pos_emb": s * jax.random.normal(ks[1], (SEQ, HIDDEN), jnp.float32),
        "wq": s * jax.random.normal(ks[2], (HIDDEN, HIDDEN), jnp.float32),
        "wk": s * jax.random.normal(ks[3], (HIDDEN, HIDDEN), jnp.float32),
        "wv": s * jax.random.normal(ks[4], (HIDDEN, HIDDEN), jnp.float32),
        "wo": s * jax.random.normal(ks[5], (HIDDEN, HIDDEN), jnp.float32),
        "w1": s * jax.random.normal(ks[6], (HIDDEN, FFN), jnp.float32),
        "w2": s * jax.random.normal(ks[7], (FFN, HIDDEN), jnp.float32),
        "bq": jnp.zeros((HIDDEN,), jnp.float32),
        "bk": jnp.zeros((HIDDEN,), jnp.float32),
        "bv": jnp.zeros((HIDDEN,), jnp.float32),
        "bo": jnp.zeros((HIDDEN,), jnp.float32),
        "b1": jnp.zeros((FFN,), jnp.float32),
        "b2": jnp.zeros((HIDDEN,), jnp.float32),
        "ln1_g": jnp.ones((HIDDEN,), jnp.float32),
        "ln1_b": jnp.zeros((HIDDEN,), jnp.float32),
        "ln2_g": jnp.ones((HIDDEN,), jnp.float32),
        "ln2_b": jnp.zeros((HIDDEN,), jnp.float32),
    }


def pack_params(p):
    """Fold attention scale, lane-pad everything, pack into two slabs."""
    scale = 1.0 / math.sqrt(HIDDEN)

    def pad2(w, rows, cols):
        r, c = w.shape
        return jnp.zeros((rows, cols), jnp.float32).at[:r, :c].set(w)

    w_slab = jnp.concatenate(
        [pad2(p["wq"] * scale, DP, DP), pad2(p["wk"], DP, DP),
         pad2(p["wv"], DP, DP), pad2(p["wo"], DP, DP),
         pad2(p["w1"], DP, DP), pad2(p["w2"], DP, DP)],
        axis=1).astype(jnp.bfloat16)                              # [DP, 6*DP] bf16

    def pad_row(v):
        return jnp.zeros((DP,), jnp.float32).at[:v.shape[0]].set(v)

    b_slab = jnp.zeros((B_ROWS, DP), jnp.float32)
    b_slab = b_slab.at[_BQ].set(pad_row(p["bq"] * scale))
    b_slab = b_slab.at[_BK].set(pad_row(p["bk"]))
    b_slab = b_slab.at[_BV].set(pad_row(p["bv"]))
    b_slab = b_slab.at[_BO].set(pad_row(p["bo"]))
    b_slab = b_slab.at[_B1].set(pad_row(p["b1"]))
    b_slab = b_slab.at[_B2].set(pad_row(p["b2"]))
    b_slab = b_slab.at[_G1].set(pad_row(p["ln1_g"]))
    b_slab = b_slab.at[_BE1].set(pad_row(p["ln1_b"]))
    b_slab = b_slab.at[_G2].set(pad_row(p["ln2_g"]))
    b_slab = b_slab.at[_BE2].set(pad_row(p["ln2_b"]))
    b_slab = b_slab.at[_LMASK].set(
        (jnp.arange(DP) < HIDDEN).astype(jnp.float32))            # lane-validity

    tok_emb_p = pad2(p["tok_emb"], VOCAB, DP)
    pos_emb_p = pad2(p["pos_emb"], SEQ, DP)
    return tok_emb_p, pos_emb_p, w_slab, b_slab


def tokenize(text):
    """Deterministic toy tokenizer: id 0 acts like [CLS]; chars map to ids.

    Also builds the additive key-padding mask (0 for real keys, -1e30 for pad)
    on the host, so the kernel adds it directly before the softmax.
    """
    # TODO(synk): real HuggingFace tokenizers (BPE/WordPiece) have no Pallas /
    # in-script equivalent; this is a deterministic stand-in.
    ids = [0] + [(ord(c) % (VOCAB - 1)) + 1 for c in text]
    n_valid = min(len(ids), SEQ)
    ids = (ids + [0] * SEQ)[:SEQ]
    ids = jnp.asarray(ids, dtype=jnp.int32)
    key_mask = jnp.where(jnp.arange(DP) < n_valid, 0.0, NEG_INF)
    return ids, key_mask.astype(jnp.float32).reshape(1, DP)


class LanguageModelInstructionEncoder:
    """JAX/Pallas counterpart of the PyTorch module's forward semantics."""

    def __init__(self, lang_model_key="bert", seed=0):
        self.lang_model_key = lang_model_key.lower()
        assert self.lang_model_key in _KNOWN_KEYS
        p = init_params(jax.random.PRNGKey(seed))
        (self.tok_emb_p, self.pos_emb_p,
         self.w_slab, self.b_slab) = pack_params(p)

    def encode_batch(self, texts):
        """Batched path: grid=(B,), weight slab DMA'd once, VMEM-resident."""
        toks = [tokenize(t) for t in texts]
        ids = jnp.stack([t[0] for t in toks], axis=0)             # [B, SEQ]
        masks = jnp.stack([t[1] for t in toks], axis=0)           # [B, 1, DP]
        return _encode_batch(ids, masks, self.tok_emb_p, self.pos_emb_p,
                             self.w_slab, self.b_slab)            # [B, SEQ, H]

    def lang_callback(self, text):
        # TODO(synk): with a fixed SEQ, word_embeddings still contains rows
        # for padded positions (HF returns only real tokens); padded keys are
        # masked out of attention (BERT attention_mask semantics), but callers
        # must slice by the true token count if they need exact HF behavior.
        hidden = self.encode_batch([text])[0]                     # [SEQ, HIDDEN]
        return {"word_embeddings": hidden[1:],
                "sentence_embedding": hidden[0].reshape(1, -1)}

    def forward(self, text):
        return self.lang_callback(text)

    __call__ = forward


# --------------------------------- main ----------------------------------- #

if __name__ == "__main__":
    enc = LanguageModelInstructionEncoder("bert", seed=0)

    # single-text forward (spec semantics)
    out = enc("pick up the red block")
    jax.block_until_ready(out["word_embeddings"])
    jax.block_until_ready(out["sentence_embedding"])
    assert out["word_embeddings"].shape == (SEQ - 1, HIDDEN)
    assert out["sentence_embedding"].shape == (1, HIDDEN)
    assert bool(jnp.all(jnp.isfinite(out["word_embeddings"])))
    assert bool(jnp.all(jnp.isfinite(out["sentence_embedding"])))

    # batched path: one pallas_call, weights fetched once for all sequences
    batch_hidden = enc.encode_batch(
        ["pick up the red block", "open the drawer", "push the blue button"])
    jax.block_until_ready(batch_hidden)
    assert batch_hidden.shape == (3, SEQ, HIDDEN)
    assert bool(jnp.all(jnp.isfinite(batch_hidden)))

    print("KERNEL_OK")
</pallas_src>

<mosaic_0001>
module attributes {stable_mosaic.version = 11 : i64} {
  func.func @encoder_kernel(%arg0: i32, %arg1: memref<1x8xi32, #tpu.memory_space<smem>>, %arg2: memref<1x1x128xf32, #tpu.memory_space<vmem>>, %arg3: memref<64x128xf32, #tpu.memory_space<vmem>>, %arg4: memref<8x128xf32, #tpu.memory_space<vmem>>, %arg5: memref<128x768xbf16, #tpu.memory_space<vmem>>, %arg6: memref<16x128xf32, #tpu.memory_space<vmem>>, %arg7: memref<1x8x128xf32, #tpu.memory_space<vmem>>, %arg8: memref<8x128xf32, #tpu.memory_space<vmem>>) attributes {dimension_semantics = [#tpu.dimension_semantics<parallel>], iteration_bounds = array<i64: 1>, scalar_prefetch = 1 : i64, scratch_operands = 1 : i64, tpu.core_type = #tpu.core_type<tc>, window_params = [{transform_indices = @transform_0, window_bounds = array<i64: 1, 1, 128>}, {pipeline_mode = #tpu.pipeline_mode<synchronous>, transform_indices = @transform_1, window_bounds = array<i64: 64, 128>}, {pipeline_mode = #tpu.pipeline_mode<synchronous>, transform_indices = @transform_2, window_bounds = array<i64: 8, 128>}, {pipeline_mode = #tpu.pipeline_mode<synchronous>, transform_indices = @transform_3, window_bounds = array<i64: 128, 768>}, {pipeline_mode = #tpu.pipeline_mode<synchronous>, transform_indices = @transform_4, window_bounds = array<i64: 16, 128>}, {transform_indices = @transform_5, window_bounds = array<i64: 1, 8, 128>}]} {
    %0 = arith.index_cast %arg0 : i32 to index
    %c0 = arith.constant 0 : index
    %1 = memref.load %arg1[%0, %c0] : memref<1x8xi32, #tpu.memory_space<smem>>
    %2 = arith.index_cast %1 : i32 to index
    %c0_0 = arith.constant 0 : index
    %3 = vector.load %arg3[%2, %c0_0] : memref<64x128xf32, #tpu.memory_space<vmem>>, vector<1x128xf32>
    %c0_1 = arith.constant 0 : index
    %c0_2 = arith.constant 0 : index
    %4 = vector.load %arg8[%c0_1, %c0_2] : memref<8x128xf32, #tpu.memory_space<vmem>>, vector<1x128xf32>
    tpu.vector_store %arg8[%c0_1, %c0_2], %3 {strides = array<i32>} : memref<8x128xf32, #tpu.memory_space<vmem>>, vector<1x128xf32>,
    %5 = arith.index_cast %arg0 : i32 to index
    %c1 = arith.constant 1 : index
    %6 = memref.load %arg1[%5, %c1] : memref<1x8xi32, #tpu.memory_space<smem>>
    %7 = arith.index_cast %6 : i32 to index
    %c0_3 = arith.constant 0 : index
    %8 = vector.load %arg3[%7, %c0_3] : memref<64x128xf32, #tpu.memory_space<vmem>>, vector<1x128xf32>
    %c1_4 = arith.constant 1 : index
    %c0_5 = arith.constant 0 : index
    %9 = vector.load %arg8[%c1_4, %c0_5] : memref<8x128xf32, #tpu.memory_space<vmem>>, vector<1x128xf32>
    tpu.vector_store %arg8[%c1_4, %c0_5], %8 {strides = array<i32>} : memref<8x128xf32, #tpu.memory_space<vmem>>, vector<1x128xf32>,
    %10 = arith.index_cast %arg0 : i32 to index
    %c2 = arith.constant 2 : index
    %11 = memref.load %arg1[%10, %c2] : memref<1x8xi32, #tpu.memory_space<smem>>
    %12 = arith.index_cast %11 : i32 to index
    %c0_6 = arith.constant 0 : index
    %13 = vector.load %arg3[%12, %c0_6] : memref<64x128xf32, #tpu.memory_space<vmem>>, vector<1x128xf32>
    %c2_7 = arith.constant 2 : index
    %c0_8 = arith.constant 0 : index
    %14 = vector.load %arg8[%c2_7, %c0_8] : memref<8x128xf32, #tpu.memory_space<vmem>>, vector<1x128xf32>
    tpu.vector_store %arg8[%c2_7, %c0_8], %13 {strides = array<i32>} : memref<8x128xf32, #tpu.memory_space<vmem>>, vector<1x128xf32>,
    %15 = arith.index_cast %arg0 : i32 to index
    %c3 = arith.constant 3 : index
    %16 = memref.load %arg1[%15, %c3] : memref<1x8xi32, #tpu.memory_space<smem>>
    %17 = arith.index_cast %16 : i32 to index
    %c0_9 = arith.constant 0 : index
    %18 = vector.load %arg3[%17, %c0_9] : memref<64x128xf32, #tpu.memory_space<vmem>>, vector<1x128xf32>
    %c3_10 = arith.constant 3 : index
    %c0_11 = arith.constant 0 : index
    %19 = vector.load %arg8[%c3_10, %c0_11] : memref<8x128xf32, #tpu.memory_space<vmem>>, vector<1x128xf32>
    tpu.vector_store %arg8[%c3_10, %c0_11], %18 {strides = array<i32>} : memref<8x128xf32, #tpu.memory_space<vmem>>, vector<1x128xf32>,
    %20 = arith.index_cast %arg0 : i32 to index
    %c4 = arith.constant 4 : index
    %21 = memref.load %arg1[%20, %c4] : memref<1x8xi32, #tpu.memory_space<smem>>
    %22 = arith.index_cast %21 : i32 to index
    %c0_12 = arith.constant 0 : index
    %23 = vector.load %arg3[%22, %c0_12] : memref<64x128xf32, #tpu.memory_space<vmem>>, vector<1x128xf32>
    %c4_13 = arith.constant 4 : index
    %c0_14 = arith.constant 0 : index
    %24 = vector.load %arg8[%c4_13, %c0_14] : memref<8x128xf32, #tpu.memory_space<vmem>>, vector<1x128xf32>
    tpu.vector_store %arg8[%c4_13, %c0_14], %23 {strides = array<i32>} : memref<8x128xf32, #tpu.memory_space<vmem>>, vector<1x128xf32>,
    %25 = arith.index_cast %arg0 : i32 to index
    %c5 = arith.constant 5 : index
    %26 = memref.load %arg1[%25, %c5] : memref<1x8xi32, #tpu.memory_space<smem>>
    %27 = arith.index_cast %26 : i32 to index
    %c0_15 = arith.constant 0 : index
    %28 = vector.load %arg3[%27, %c0_15] : memref<64x128xf32, #tpu.memory_space<vmem>>, vector<1x128xf32>
    %c5_16 = arith.constant 5 : index
    %c0_17 = arith.constant 0 : index
    %29 = vector.load %arg8[%c5_16, %c0_17] : memref<8x128xf32, #tpu.memory_space<vmem>>, vector<1x128xf32>
    tpu.vector_store %arg8[%c5_16, %c0_17], %28 {strides = array<i32>} : memref<8x128xf32, #tpu.memory_space<vmem>>, vector<1x128xf32>,
    %30 = arith.index_cast %arg0 : i32 to index
    %c6 = arith.constant 6 : index
    %31 = memref.load %arg1[%30, %c6] : memref<1x8xi32, #tpu.memory_space<smem>>
    %32 = arith.index_cast %31 : i32 to index
    %c0_18 = arith.constant 0 : index
    %33 = vector.load %arg3[%32, %c0_18] : memref<64x128xf32, #tpu.memory_space<vmem>>, vector<1x128xf32>
    %c6_19 = arith.constant 6 : index
    %c0_20 = arith.constant 0 : index
    %34 = vector.load %arg8[%c6_19, %c0_20] : memref<8x128xf32, #tpu.memory_space<vmem>>, vector<1x128xf32>
    tpu.vector_store %arg8[%c6_19, %c0_20], %33 {strides = array<i32>} : memref<8x128xf32, #tpu.memory_space<vmem>>, vector<1x128xf32>,
    %35 = arith.index_cast %arg0 : i32 to index
    %c7 = arith.constant 7 : index
    %36 = memref.load %arg1[%35, %c7] : memref<1x8xi32, #tpu.memory_space<smem>>
    %37 = arith.index_cast %36 : i32 to index
    %c0_21 = arith.constant 0 : index
    %38 = vector.load %arg3[%37, %c0_21] : memref<64x128xf32, #tpu.memory_space<vmem>>, vector<1x128xf32>
    %c7_22 = arith.constant 7 : index
    %c0_23 = arith.constant 0 : index
    %39 = vector.load %arg8[%c7_22, %c0_23] : memref<8x128xf32, #tpu.memory_space<vmem>>, vector<1x128xf32>
    tpu.vector_store %arg8[%c7_22, %c0_23], %38 {strides = array<i32>} : memref<8x128xf32, #tpu.memory_space<vmem>>, vector<1x128xf32>,
    %c0_24 = arith.constant 0 : index
    %c0_25 = arith.constant 0 : index
    %40 = vector.load %arg8[%c0_24, %c0_25] : memref<8x128xf32, #tpu.memory_space<vmem>>, vector<8x128xf32>
    %c0_26 = arith.constant 0 : index
    %c0_27 = arith.constant 0 : index
    %41 = vector.load %arg4[%c0_26, %c0_27] : memref<8x128xf32, #tpu.memory_space<vmem>>, vector<8x128xf32>
    %42 = arith.addf %40, %41 : vector<8x128xf32>
    %c10 = arith.constant 10 : index
    %c0_28 = arith.constant 0 : index
    %43 = vector.load %arg6[%c10, %c0_28] : memref<16x128xf32, #tpu.memory_space<vmem>>, vector<1x128xf32>
    %44 = arith.truncf %42 : vector<8x128xf32> to vector<8x128xbf16>
    %c0_29 = arith.constant 0 : index
    %c0_30 = arith.constant 0 : index
    %45 = vector.load %arg5[%c0_29, %c0_30] : memref<128x768xbf16, #tpu.memory_space<vmem>>, vector<128x384xbf16>
    %cst = arith.constant dense<0.000000e+00> : vector<8x384xf32>
    %46 = tpu.matmul %44, %45, %cst {dimension_numbers = #tpu.dot_dimension_numbers<[1], [0], [0], [1], [0, 0, 1, 1], [], []>} : vector<8x128xbf16>, vector<128x384xbf16>, vector<8x384xf32> -> vector<8x384xf32>
    %47 = vector.extract_strided_slice %46 {offsets = [0, 0], sizes = [8, 128], strides = [1, 1]} : vector<8x384xf32> to vector<8x128xf32>
    %c0_31 = arith.constant 0 : index
    %c0_32 = arith.constant 0 : index
    %48 = vector.load %arg6[%c0_31, %c0_32] : memref<16x128xf32, #tpu.memory_space<vmem>>, vector<1x128xf32>
    %49 = vector.broadcast %48 : vector<1x128xf32> to vector<8x128xf32>
    %50 = arith.addf %47, %49 : vector<8x128xf32>
    %51 = vector.extract_strided_slice %46 {offsets = [0, 128], sizes = [8, 128], strides = [1, 1]} : vector<8x384xf32> to vector<8x128xf32>
    %c1_33 = arith.constant 1 : index
    %c0_34 = arith.constant 0 : index
    %52 = vector.load %arg6[%c1_33, %c0_34] : memref<16x128xf32, #tpu.memory_space<vmem>>, vector<1x128xf32>
    %53 = vector.broadcast %52 : vector<1x128xf32> to vector<8x128xf32>
    %54 = arith.addf %51, %53 : vector<8x128xf32>
    %55 = vector.extract_strided_slice %46 {offsets = [0, 256], sizes = [8, 128], strides = [1, 1]} : vector<8x384xf32> to vector<8x128xf32>
    %c2_35 = arith.constant 2 : index
    %c0_36 = arith.constant 0 : index
    %56 = vector.load %arg6[%c2_35, %c0_36] : memref<16x128xf32, #tpu.memory_space<vmem>>, vector<1x128xf32>
    %57 = vector.broadcast %56 : vector<1x128xf32> to vector<8x128xf32>
    %58 = arith.addf %55, %57 : vector<8x128xf32>
    %cst_37 = arith.constant dense<0.000000e+00> : vector<8x8xf32>
    %59 = tpu.matmul %50, %54, %cst_37 {dimension_numbers = #tpu.dot_dimension_numbers<[1], [1], [0], [0], [0, 0, 1, 0], [], []>} : vector<8x128xf32>, vector<8x128xf32>, vector<8x8xf32> -> vector<8x8xf32>
    %c0_38 = arith.constant 0 : index
    %c0_39 = arith.constant 0 : index
    %c0_40 = arith.constant 0 : index
    %60 = vector.load %arg2[%c0_38, %c0_39, %c0_40] : memref<1x1x128xf32, #tpu.memory_space<vmem>>, vector<1x1x128xf32>
    %61 = vector.shape_cast %60 : vector<1x1x128xf32> to vector<1x128xf32>
    %62 = vector.extract_strided_slice %61 {offsets = [0, 0], sizes = [1, 8], strides = [1, 1]} : vector<1x128xf32> to vector<1x8xf32>
    %63 = vector.broadcast %62 : vector<1x8xf32> to vector<8x8xf32>
    %64 = arith.addf %59, %63 : vector<8x8xf32>
    %cst_41 = arith.constant dense<0xFF800000> : vector<8xf32>
    %65 = vector.multi_reduction <maximumf>, %64, %cst_41 [1] : vector<8x8xf32> to vector<8xf32>
    %66 = vector.shape_cast %65 : vector<8xf32> to vector<8x1xf32>
    %67 = vector.broadcast %66 : vector<8x1xf32> to vector<8x8xf32>
    %68 = arith.subf %64, %67 : vector<8x8xf32>
    %69 = math.exp %68 : vector<8x8xf32>
    %cst_42 = arith.constant dense<0.000000e+00> : vector<8xf32>
    %70 = vector.multi_reduction <add>, %69, %cst_42 [1] : vector<8x8xf32> to vector<8xf32>
    %71 = vector.shape_cast %70 : vector<8xf32> to vector<8x1xf32>
    %72 = tpu.reciprocal %71 {approx = true} : vector<8x1xf32> -> vector<8x1xf32>
    %73 = vector.broadcast %72 : vector<8x1xf32> to vector<8x8xf32>
    %74 = arith.mulf %69, %73 : vector<8x8xf32>
    %cst_43 = arith.constant dense<0.000000e+00> : vector<8x128xf32>
    %75 = tpu.matmul %74, %58, %cst_43 {dimension_numbers = #tpu.dot_dimension_numbers<[1], [0], [0], [1], [0, 0, 1, 1], [], []>} : vector<8x8xf32>, vector<8x128xf32>, vector<8x128xf32> -> vector<8x128xf32>
    %76 = arith.truncf %75 : vector<8x128xf32> to vector<8x128xbf16>
    %c0_44 = arith.constant 0 : index
    %c384 = arith.constant 384 : index
    %77 = vector.load %arg5[%c0_44, %c384] : memref<128x768xbf16, #tpu.memory_space<vmem>>, vector<128x128xbf16>
    %cst_45 = arith.constant dense<0.000000e+00> : vector<8x128xf32>
    %78 = tpu.matmul %76, %77, %cst_45 {dimension_numbers = #tpu.dot_dimension_numbers<[1], [0], [0], [1], [0, 0, 1, 1], [], []>} : vector<8x128xbf16>, vector<128x128xbf16>, vector<8x128xf32> -> vector<8x128xf32>
    %c3_46 = arith.constant 3 : index
    %c0_47 = arith.constant 0 : index
    %79 = vector.load %arg6[%c3_46, %c0_47] : memref<16x128xf32, #tpu.memory_space<vmem>>, vector<1x128xf32>
    %80 = vector.broadcast %79 : vector<1x128xf32> to vector<8x128xf32>
    %81 = arith.addf %78, %80 : vector<8x128xf32>
    %82 = arith.addf %42, %81 : vector<8x128xf32>
    %c6_48 = arith.constant 6 : index
    %c0_49 = arith.constant 0 : index
    %83 = vector.load %arg6[%c6_48, %c0_49] : memref<16x128xf32, #tpu.memory_space<vmem>>, vector<1x128xf32>
    %c7_50 = arith.constant 7 : index
    %c0_51 = arith.constant 0 : index
    %84 = vector.load %arg6[%c7_50, %c0_51] : memref<16x128xf32, #tpu.memory_space<vmem>>, vector<1x128xf32>
    %cst_52 = arith.constant dense<0.000000e+00> : vector<8xf32>
    %85 = vector.multi_reduction <add>, %82, %cst_52 [1] : vector<8x128xf32> to vector<8xf32>
    %86 = vector.shape_cast %85 : vector<8xf32> to vector<8x1xf32>
    %cst_53 = arith.constant 3.125000e-02 : f32
    %87 = vector.broadcast %cst_53 : f32 to vector<8x1xf32>
    %88 = arith.mulf %86, %87 : vector<8x1xf32>
    %89 = vector.broadcast %88 : vector<8x1xf32> to vector<8x128xf32>
    %90 = arith.subf %82, %89 : vector<8x128xf32>
    %91 = vector.broadcast %43 : vector<1x128xf32> to vector<8x128xf32>
    %92 = arith.mulf %90, %91 : vector<8x128xf32>
    %93 = arith.mulf %92, %92 : vector<8x128xf32>
    %cst_54 = arith.constant dense<0.000000e+00> : vector<8xf32>
    %94 = vector.multi_reduction <add>, %93, %cst_54 [1] : vector<8x128xf32> to vector<8xf32>
    %95 = vector.shape_cast %94 : vector<8xf32> to vector<8x1xf32>
    %cst_55 = arith.constant 3.125000e-02 : f32
    %96 = vector.broadcast %cst_55 : f32 to vector<8x1xf32>
    %97 = arith.mulf %95, %96 : vector<8x1xf32>
    %cst_56 = arith.constant 9.99999996E-13 : f32
    %98 = vector.broadcast %cst_56 : f32 to vector<8x1xf32>
    %99 = arith.addf %97, %98 : vector<8x1xf32>
    %100 = math.rsqrt %99 : vector<8x1xf32>
    %101 = vector.broadcast %100 : vector<8x1xf32> to vector<8x128xf32>
    %102 = arith.mulf %92, %101 : vector<8x128xf32>
    %103 = vector.broadcast %83 : vector<1x128xf32> to vector<8x128xf32>
    %104 = arith.mulf %102, %103 : vector<8x128xf32>
    %105 = vector.broadcast %84 : vector<1x128xf32> to vector<8x128xf32>
    %106 = arith.addf %104, %105 : vector<8x128xf32>
    %107 = arith.truncf %106 : vector<8x128xf32> to vector<8x128xbf16>
    %c0_57 = arith.constant 0 : index
    %c512 = arith.constant 512 : index
    %108 = vector.load %arg5[%c0_57, %c512] : memref<128x768xbf16, #tpu.memory_space<vmem>>, vector<128x128xbf16>
    %cst_58 = arith.constant dense<0.000000e+00> : vector<8x128xf32>
    %109 = tpu.matmul %107, %108, %cst_58 {dimension_numbers = #tpu.dot_dimension_numbers<[1], [0], [0], [1], [0, 0, 1, 1], [], []>} : vector<8x128xbf16>, vector<128x128xbf16>, vector<8x128xf32> -> vector<8x128xf32>
    %c4_59 = arith.constant 4 : index
    %c0_60 = arith.constant 0 : index
    %110 = vector.load %arg6[%c4_59, %c0_60] : memref<16x128xf32, #tpu.memory_space<vmem>>, vector<1x128xf32>
    %111 = vector.broadcast %110 : vector<1x128xf32> to vector<8x128xf32>
    %112 = arith.addf %109, %111 : vector<8x128xf32>
    %cst_61 = arith.constant 5.000000e-01 : f32
    %113 = vector.broadcast %cst_61 : f32 to vector<8x128xf32>
    %114 = arith.mulf %113, %112 : vector<8x128xf32>
    %cst_62 = arith.constant 4.471500e-02 : f32
    %115 = vector.broadcast %cst_62 : f32 to vector<8x128xf32>
    %116 = arith.mulf %115, %112 : vector<8x128xf32>
    %117 = arith.mulf %116, %112 : vector<8x128xf32>
    %118 = arith.mulf %117, %112 : vector<8x128xf32>
    %119 = arith.addf %112, %118 : vector<8x128xf32>
    %cst_63 = arith.constant 0.797884583 : f32
    %120 = vector.broadcast %cst_63 : f32 to vector<8x128xf32>
    %121 = arith.mulf %120, %119 : vector<8x128xf32>
    %122 = math.tanh %121 : vector<8x128xf32>
    %cst_64 = arith.constant 1.000000e+00 : f32
    %123 = vector.broadcast %cst_64 : f32 to vector<8x128xf32>
    %124 = arith.addf %123, %122 : vector<8x128xf32>
    %125 = arith.mulf %114, %124 : vector<8x128xf32>
    %126 = arith.truncf %125 : vector<8x128xf32> to vector<8x128xbf16>
    %c0_65 = arith.constant 0 : index
    %c640 = arith.constant 640 : index
    %127 = vector.load %arg5[%c0_65, %c640] : memref<128x768xbf16, #tpu.memory_space<vmem>>, vector<128x128xbf16>
    %cst_66 = arith.constant dense<0.000000e+00> : vector<8x128xf32>
    %128 = tpu.matmul %126, %127, %cst_66 {dimension_numbers = #tpu.dot_dimension_numbers<[1], [0], [0], [1], [0, 0, 1, 1], [], []>} : vector<8x128xbf16>, vector<128x128xbf16>, vector<8x128xf32> -> vector<8x128xf32>
    %c5_67 = arith.constant 5 : index
    %c0_68 = arith.constant 0 : index
    %129 = vector.load %arg6[%c5_67, %c0_68] : memref<16x128xf32, #tpu.memory_space<vmem>>, vector<1x128xf32>
    %130 = vector.broadcast %129 : vector<1x128xf32> to vector<8x128xf32>
    %131 = arith.addf %128, %130 : vector<8x128xf32>
    %132 = arith.addf %106, %131 : vector<8x128xf32>
    %c8 = arith.constant 8 : index
    %c0_69 = arith.constant 0 : index
    %133 = vector.load %arg6[%c8, %c0_69] : memref<16x128xf32, #tpu.memory_space<vmem>>, vector<1x128xf32>
    %c9 = arith.constant 9 : index
    %c0_70 = arith.constant 0 : index
    %134 = vector.load %arg6[%c9, %c0_70] : memref<16x128xf32, #tpu.memory_space<vmem>>, vector<1x128xf32>
    %cst_71 = arith.constant dense<0.000000e+00> : vector<8xf32>
    %135 = vector.multi_reduction <add>, %132, %cst_71 [1] : vector<8x128xf32> to vector<8xf32>
    %136 = vector.shape_cast %135 : vector<8xf32> to vector<8x1xf32>
    %cst_72 = arith.constant 3.125000e-02 : f32
    %137 = vector.broadcast %cst_72 : f32 to vector<8x1xf32>
    %138 = arith.mulf %136, %137 : vector<8x1xf32>
    %139 = vector.broadcast %138 : vector<8x1xf32> to vector<8x128xf32>
    %140 = arith.subf %132, %139 : vector<8x128xf32>
    %141 = vector.broadcast %43 : vector<1x128xf32> to vector<8x128xf32>
    %142 = arith.mulf %140, %141 : vector<8x128xf32>
    %143 = arith.mulf %142, %142 : vector<8x128xf32>
    %cst_73 = arith.constant dense<0.000000e+00> : vector<8xf32>
    %144 = vector.multi_reduction <add>, %143, %cst_73 [1] : vector<8x128xf32> to vector<8xf32>
    %145 = vector.shape_cast %144 : vector<8xf32> to vector<8x1xf32>
    %cst_74 = arith.constant 3.125000e-02 : f32
    %146 = vector.broadcast %cst_74 : f32 to vector<8x1xf32>
    %147 = arith.mulf %145, %146 : vector<8x1xf32>
    %cst_75 = arith.constant 9.99999996E-13 : f32
    %148 = vector.broadcast %cst_75 : f32 to vector<8x1xf32>
    %149 = arith.addf %147, %148 : vector<8x1xf32>
    %150 = math.rsqrt %149 : vector<8x1xf32>
    %151 = vector.broadcast %150 : vector<8x1xf32> to vector<8x128xf32>
    %152 = arith.mulf %142, %151 : vector<8x128xf32>
    %153 = vector.broadcast %133 : vector<1x128xf32> to vector<8x128xf32>
    %154 = arith.mulf %152, %153 : vector<8x128xf32>
    %155 = vector.broadcast %134 : vector<1x128xf32> to vector<8x128xf32>
    %156 = arith.addf %154, %155 : vector<8x128xf32>
    %c0_76 = arith.constant 0 : index
    %c0_77 = arith.constant 0 : index
    %c0_78 = arith.constant 0 : index
    %157 = vector.load %arg7[%c0_76, %c0_77, %c0_78] : memref<1x8x128xf32, #tpu.memory_space<vmem>>, vector<1x8x128xf32>
    %158 = vector.shape_cast %157 : vector<1x8x128xf32> to vector<8x128xf32>
    %159 = vector.shape_cast %156 : vector<8x128xf32> to vector<1x8x128xf32>
    tpu.vector_store %arg7[%c0_76, %c0_77, %c0_78], %159 {strides = array<i32>} : memref<1x8x128xf32, #tpu.memory_space<vmem>>, vector<1x8x128xf32>,
    return
  }
  func.func @transform_0(%arg0: i32, %arg1: memref<1x8xi32, #tpu.memory_space<smem>>) -> (i32, i32, i32) {
    %c0_i32 = arith.constant 0 : i32
    %c0_i32_0 = arith.constant 0 : i32
    %c0_i32_1 = arith.constant 0 : i32
    return %arg0, %c0_i32, %c0_i32_0 : i32, i32, i32
  }
  func.func @transform_1(%arg0: i32, %arg1: memref<1x8xi32, #tpu.memory_space<smem>>) -> (i32, i32) {
    %c0_i32 = arith.constant 0 : i32
    %c0_i32_0 = arith.constant 0 : i32
    %c0_i32_1 = arith.constant 0 : i32
    return %c0_i32, %c0_i32_0 : i32, i32
  }
  func.func @transform_2(%arg0: i32, %arg1: memref<1x8xi32, #tpu.memory_space<smem>>) -> (i32, i32) {
    %c0_i32 = arith.constant 0 : i32
    %c0_i32_0 = arith.constant 0 : i32
    %c0_i32_1 = arith.constant 0 : i32
    return %c0_i32, %c0_i32_0 : i32, i32
  }
  func.func @transform_3(%arg0: i32, %arg1: memref<1x8xi32, #tpu.memory_space<smem>>) -> (i32, i32) {
    %c0_i32 = arith.constant 0 : i32
    %c0_i32_0 = arith.constant 0 : i32
    %c0_i32_1 = arith.constant 0 : i32
    return %c0_i32, %c0_i32_0 : i32, i32
  }
  func.func @transform_4(%arg0: i32, %arg1: memref<1x8xi32, #tpu.memory_space<smem>>) -> (i32, i32) {
    %c0_i32 = arith.constant 0 : i32
    %c0_i32_0 = arith.constant 0 : i32
    %c0_i32_1 = arith.constant 0 : i32
    return %c0_i32, %c0_i32_0 : i32, i32
  }
  func.func @transform_5(%arg0: i32, %arg1: memref<1x8xi32, #tpu.memory_space<smem>>) -> (i32, i32, i32) {
    %c0_i32 = arith.constant 0 : i32
    %c0_i32_0 = arith.constant 0 : i32
    %c0_i32_1 = arith.constant 0 : i32
    return %arg0, %c0_i32, %c0_i32_0 : i32, i32, i32
  }
}

</mosaic_0001>

<llo_original>
// kernel: _encode_batch.1
$region0: #{_encode_batch.1}
  #allocation0 [shape = 'u32[]', space=smem, size = 0x4, offset = 0x4, fixed_abs, tag = 'smem constant byte address 0x4 - core index']
  #allocation1 [shape = 'u32[144,128]{1,0:T(1,128)}', space=vmem, size = 0x12000, scoped, tag = 'internal scratch']
  #allocation2 [shape = 'f32[8,128]{1,0:T(8,128)}', space=vmem, size = 0x1000, scoped, tag = 'scratch operand']
  #allocation3 [shape = 's32[1]{0}', space=sflag, size = 0x4, scoped, tag = 'scoped memory for _encode_batch.1']
  #allocation4 [shape = 'u8[512]{0}', space=smem, size = 0x200, scoped, tag = 'prefetched SMEM operand 0']
  %s0 = inlined_call_operand.hbm [shape: s32[1,8], index: 0, kind: input, shape index: {}]
  %s1 = inlined_call_operand.vmem [shape: f32[1,1,128], index: 1, kind: input, shape index: {}]
  %s2 = inlined_call_operand.hbm [shape: f32[64,128], index: 2, kind: input, shape index: {}]
  %s3 = inlined_call_operand.hbm [shape: f32[8,128], index: 3, kind: input, shape index: {}]
  %s4 = inlined_call_operand.hbm [shape: bf16[128,768], index: 4, kind: input, shape index: {}]
  %s5 = inlined_call_operand.hbm [shape: f32[16,128], index: 5, kind: input, shape index: {}]
  %s6 = inlined_call_operand.hbm [shape: f32[1,8,128], index: 6, kind: output, shape index: {}]
  %s7 = sld [smem:[#allocation0]]
  $region46: #{_encode_batch.1} parent=0
    _
  %s9 = ssub.s32 1, %s7
  %s10 = scalar_select 0, %s9, %s7
  %12 = dma.hbm_to_smem %s0, 16, [#allocation4], [#allocation3]
  %13 = dma.done [#allocation3], 16
  %14 = sfence
  $region1: #{_encode_batch.1} parent=0
    #allocation5 [shape = 'u8[32768]{0}', space=vmem, size = 0x8000, scoped, tag = 'input window, operand 2, single buffered']
    #allocation6 [shape = 's32[1]{0}', space=sflag, size = 0x4, scoped, tag = 'scoped memory for _encode_batch.1']
    #allocation7 [shape = 's32[1]{0}', space=sflag, size = 0x4, scoped, tag = 'scoped memory for _encode_batch.1']
    #allocation8 [shape = 'u8[4096]{0}', space=vmem, size = 0x1000, scoped, tag = 'input window, operand 3, single buffered']
    #allocation9 [shape = 's32[1]{0}', space=sflag, size = 0x4, scoped, tag = 'scoped memory for _encode_batch.1']
    #allocation10 [shape = 'u8[196608]{0}', space=vmem, size = 0x30000, scoped, tag = 'input window, operand 4, single buffered']
    #allocation11 [shape = 'u8[8192]{0}', space=vmem, size = 0x2000, scoped, tag = 'input window, operand 5, single buffered']
    #allocation12 [shape = 's32[1]{0}', space=sflag, size = 0x4, scoped, tag = 'scoped memory for _encode_batch.1']
    #allocation13 [shape = 'u8[4096]{0}', space=vmem, size = 0x1000, scoped, tag = 'output window, operand 0, single buffered']
    %15 = vsyncpa [#allocation6], 0
    %16 = vsyncpa [#allocation9], 0
    %17 = vsyncpa [#allocation12], 0
    %18 = vsyncpa [#allocation7], 0
    // Predicated region
    $region2: #{_encode_batch.1} parent=1 // pred_check
      _
    $region3: #{_encode_batch.1} parent=1 // pred_check_branch
      %20 = sbr.rel (0) target = $region5
    $region4: #{_encode_batch.1} parent=1 // pred_region
      _
    $region5: #{_encode_batch.1} parent=1 // pred_fallthru
      _
    // Predicated region
    $region6: #{_encode_batch.1} parent=1 // pred_check
      _
    $region7: #{_encode_batch.1} parent=1 // pred_check_branch
      %22 = sbr.rel (0) target = $region9
    $region8: #{_encode_batch.1} parent=1 // pred_region
      %s24 = ssub.s32 1024, 1024
      %25 = vsyncadd [#allocation6], %s24
      %s26 = sshll.u32 [#allocation5], 4
      %s27 = int_to_ptr.vmem [resolvable:$true] %s26
      %32 = dma.hbm_to_vmem [thread:$0]  %s2, 1024, %s27, [#allocation6], 128, 128, 8
    $region9: #{_encode_batch.1} parent=1 // pred_fallthru
      _
    // Predicated region
    $region10: #{_encode_batch.1} parent=1 // pred_check
      _
    $region11: #{_encode_batch.1} parent=1 // pred_check_branch
      %34 = sbr.rel (0) target = $region13
    $region12: #{_encode_batch.1} parent=1 // pred_region
      %s36 = ssub.s32 128, 128
      %37 = vsyncadd [#allocation9], %s36
      %s39 = sshll.u32 [#allocation8], 4
      %s40 = int_to_ptr.vmem [resolvable:$true] %s39
      %42 = dma.hbm_to_vmem [thread:$0]  %s3, 128, %s40, [#allocation9]
    $region13: #{_encode_batch.1} parent=1 // pred_fallthru
      _
    // Predicated region
    $region14: #{_encode_batch.1} parent=1 // pred_check
      _
    $region15: #{_encode_batch.1} parent=1 // pred_check_branch
      %44 = sbr.rel (0) target = $region17
    $region16: #{_encode_batch.1} parent=1 // pred_region
      %s46 = ssub.s32 6144, 6144
      %47 = vsyncadd [#allocation9], %s46
      %s48 = sshll.u32 [#allocation10], 4
      %s49 = int_to_ptr.vmem [resolvable:$true] %s48
      %54 = dma.hbm_to_vmem [thread:$0]  %s4, 6144, %s49, [#allocation9], 384, 384, 24
    $region17: #{_encode_batch.1} parent=1 // pred_fallthru
      _
    // Predicated region
    $region18: #{_encode_batch.1} parent=1 // pred_check
      _
    $region19: #{_encode_batch.1} parent=1 // pred_check_branch
      %56 = sbr.rel (0) target = $region21
    $region20: #{_encode_batch.1} parent=1 // pred_region
      %s58 = ssub.s32 256, 256
      %59 = vsyncadd [#allocation12], %s58
      %s60 = sshll.u32 [#allocation11], 4
      %s61 = int_to_ptr.vmem [resolvable:$true] %s60
      %66 = dma.hbm_to_vmem [thread:$0]  %s5, 256, %s61, [#allocation12], 128, 128, 8
    $region21: #{_encode_batch.1} parent=1 // pred_fallthru
      _
    // Predicated region
    $region22: #{_encode_batch.1} parent=1 // pred_check
      _
    $region23: #{_encode_batch.1} parent=1 // pred_check_branch
      %68 = sbr.rel (0) target = $region25
    $region24: #{_encode_batch.1} parent=1 // pred_region
      %69 = dma.done [#allocation6], 1024
    $region25: #{_encode_batch.1} parent=1 // pred_fallthru
      _
    // Predicated region
    $region26: #{_encode_batch.1} parent=1 // pred_check
      _
    $region27: #{_encode_batch.1} parent=1 // pred_check_branch
      %71 = sbr.rel (0) target = $region29
    $region28: #{_encode_batch.1} parent=1 // pred_region
      %72 = dma.done [#allocation9], 128
    $region29: #{_encode_batch.1} parent=1 // pred_fallthru
      _
    // Predicated region
    $region30: #{_encode_batch.1} parent=1 // pred_check
      _
    $region31: #{_encode_batch.1} parent=1 // pred_check_branch
      %74 = sbr.rel (0) target = $region33
    $region32: #{_encode_batch.1} parent=1 // pred_region
      %75 = dma.done [#allocation9], 6144
    $region33: #{_encode_batch.1} parent=1 // pred_fallthru
      _
    // Predicated region
    $region34: #{_encode_batch.1} parent=1 // pred_check
      _
    $region35: #{_encode_batch.1} parent=1 // pred_check_branch
      %77 = sbr.rel (0) target = $region37
    $region36: #{_encode_batch.1} parent=1 // pred_region
      %78 = dma.done [#allocation12], 256
    $region37: #{_encode_batch.1} parent=1 // pred_fallthru
      _
    %s80 = smul.u32 0, 128
    %s81 = sld [smem:[#allocation4 + %s80]]
    %s82 = scalar_lea.vmem [#allocation5], %s81
    %v83 = vld [vmem:[%s82] sm:$0x1]
    %84 = vst [vmem:[#allocation2] sm:$0x1] %v83
    %s85 = sadd.s32 %s80, 1
    %s86 = sld [smem:[#allocation4 + %s85]]
    %s87 = scalar_lea.vmem [#allocation5], %s86
    %v88 = vld [vmem:[%s87] sm:$0x1]
    %89 = vst [vmem:[#allocation2 + $0x1] sm:$0x1] %v88
    %s90 = sadd.s32 %s80, 2
    %s91 = sld [smem:[#allocation4 + %s90]]
    %s92 = scalar_lea.vmem [#allocation5], %s91
    %v93 = vld [vmem:[%s92] sm:$0x1]
    %94 = vst [vmem:[#allocation2 + $0x2] sm:$0x1] %v93
    %s95 = sadd.s32 %s80, 3
    %s96 = sld [smem:[#allocation4 + %s95]]
    %s97 = scalar_lea.vmem [#allocation5], %s96
    %v98 = vld [vmem:[%s97] sm:$0x1]
    %99 = vst [vmem:[#allocation2 + $0x3] sm:$0x1] %v98
    %s100 = sadd.s32 %s80, 4
    %s101 = sld [smem:[#allocation4 + %s100]]
    %s102 = scalar_lea.vmem [#allocation5], %s101
    %v103 = vld [vmem:[%s102] sm:$0x1]
    %104 = vst [vmem:[#allocation2 + $0x4] sm:$0x1] %v103
    %s105 = sadd.s32 %s80, 5
    %s106 = sld [smem:[#allocation4 + %s105]]
    %s107 = scalar_lea.vmem [#allocation5], %s106
    %v108 = vld [vmem:[%s107] sm:$0x1]
    %109 = vst [vmem:[#allocation2 + $0x5] sm:$0x1] %v108
    %s110 = sadd.s32 %s80, 6
    %s111 = sld [smem:[#allocation4 + %s110]]
    %s112 = scalar_lea.vmem [#allocation5], %s111
    %v113 = vld [vmem:[%s112] sm:$0x1]
    %114 = vst [vmem:[#allocation2 + $0x6] sm:$0x1] %v113
    %s115 = sadd.s32 %s80, 7
    %s116 = sld [smem:[#allocation4 + %s115]]
    %s117 = scalar_lea.vmem [#allocation5], %s116
    %v118 = vld [vmem:[%s117] sm:$0x1]
    %119 = vst [vmem:[#allocation2 + $0x7] sm:$0x1] %v118
    %v120 = vld [vmem:[#allocation2] sm:$0xff]
    %v121 = vld [vmem:[#allocation8] sm:$0xff]
    %v122 = vadd.f32 %v120, %v121
    %v123 = vld [vmem:[#allocation11 + $0xa] sm:$0x1]
    %v124 = vpack.c.bf16 %v122, %v122
    %v125 = vld [vmem:[#allocation10] sm:$0xff]
    %v126 = vld [vmem:[#allocation10 + $0x8] sm:$0xf]
    %v127 = vld [vmem:[#allocation10 + $0x18] sm:$0xff]
    %v128 = vld [vmem:[#allocation10 + $0x20] sm:$0xf]
    %v129 = vld [vmem:[#allocation10 + $0x30] sm:$0xff]
    %v130 = vld [vmem:[#allocation10 + $0x38] sm:$0xf]
    %v131 = vld [vmem:[#allocation10 + $0x48] sm:$0xff]
    %v132 = vld [vmem:[#allocation10 + $0x50] sm:$0xf]
    %v133 = vld [vmem:[#allocation10 + $0x60] sm:$0xff]
    %v134 = vld [vmem:[#allocation10 + $0x68] sm:$0xf]
    %v135 = vld [vmem:[#allocation10 + $0x78] sm:$0xff]
    %v136 = vld [vmem:[#allocation10 + $0x80] sm:$0xf]
    %v137 = vld [vmem:[#allocation10 + $0x90] sm:$0xff]
    %v138 = vld [vmem:[#allocation10 + $0x98] sm:$0xf]
    %v139 = vld [vmem:[#allocation10 + $0xa8] sm:$0xff]
    %v140 = vld [vmem:[#allocation10 + $0xb0] sm:$0xf]
    %v141 = vld [vmem:[#allocation10 + $0xc0] sm:$0xff]
    %v142 = vld [vmem:[#allocation10 + $0xc8] sm:$0xf]
    %v143 = vld [vmem:[#allocation10 + $0xd8] sm:$0xff]
    %v144 = vld [vmem:[#allocation10 + $0xe0] sm:$0xf]
    %v145 = vld [vmem:[#allocation10 + $0xf0] sm:$0xff]
    %v146 = vld [vmem:[#allocation10 + $0xf8] sm:$0xf]
    %v147 = vld [vmem:[#allocation10 + $0x108] sm:$0xff]
    %v148 = vld [vmem:[#allocation10 + $0x110] sm:$0xf]
    %v149 = vld [vmem:[#allocation10 + $0x120] sm:$0xff]
    %v150 = vld [vmem:[#allocation10 + $0x128] sm:$0xf]
    %v151 = vld [vmem:[#allocation10 + $0x138] sm:$0xff]
    %v152 = vld [vmem:[#allocation10 + $0x140] sm:$0xf]
    %v153 = vld [vmem:[#allocation10 + $0x150] sm:$0xff]
    %v154 = vld [vmem:[#allocation10 + $0x158] sm:$0xf]
    %v155 = vld [vmem:[#allocation10 + $0x168] sm:$0xff]
    %v156 = vld [vmem:[#allocation10 + $0x170] sm:$0xf]
    %v189 = vunpack.c.l.b16 %v125
    %v190 = vunpack.c.h.b16 %v125
    %v191 = vunpack.c.l.b16 %v126
    %v192 = vunpack.c.l.b16 %v127
    %v193 = vunpack.c.h.b16 %v127
    %v194 = vunpack.c.l.b16 %v128
    %v195 = vunpack.c.l.b16 %v129
    %v196 = vunpack.c.h.b16 %v129
    %v197 = vunpack.c.l.b16 %v130
    %v198 = vunpack.c.l.b16 %v131
    %v199 = vunpack.c.h.b16 %v131
    %v200 = vunpack.c.l.b16 %v132
    %v201 = vunpack.c.l.b16 %v133
    %v202 = vunpack.c.h.b16 %v133
    %v203 = vunpack.c.l.b16 %v134
    %v204 = vunpack.c.l.b16 %v135
    %v205 = vunpack.c.h.b16 %v135
    %v206 = vunpack.c.l.b16 %v136
    %v207 = vunpack.c.l.b16 %v137
    %v208 = vunpack.c.h.b16 %v137
    %v209 = vunpack.c.l.b16 %v138
    %v210 = vunpack.c.l.b16 %v139
    %v211 = vunpack.c.h.b16 %v139
    %v212 = vunpack.c.l.b16 %v140
    %v213 = vunpack.c.l.b16 %v141
    %v214 = vunpack.c.h.b16 %v141
    %v215 = vunpack.c.l.b16 %v142
    %v216 = vunpack.c.l.b16 %v143
    %v217 = vunpack.c.h.b16 %v143
    %v218 = vunpack.c.l.b16 %v144
    %v219 = vunpack.c.l.b16 %v145
    %v220 = vunpack.c.h.b16 %v145
    %v221 = vunpack.c.l.b16 %v146
    %v222 = vunpack.c.l.b16 %v147
    %v223 = vunpack.c.h.b16 %v147
    %v224 = vunpack.c.l.b16 %v148
    %v225 = vunpack.c.l.b16 %v149
    %v226 = vunpack.c.h.b16 %v149
    %v227 = vunpack.c.l.b16 %v150
    %v228 = vunpack.c.l.b16 %v151
    %v229 = vunpack.c.h.b16 %v151
    %v230 = vunpack.c.l.b16 %v152
    %v231 = vunpack.c.l.b16 %v153
    %v232 = vunpack.c.h.b16 %v153
    %v233 = vunpack.c.l.b16 %v154
    %v234 = vunpack.c.l.b16 %v155
    %v235 = vunpack.c.h.b16 %v155
    %v236 = vunpack.c.l.b16 %v156
    %v237 = vpack.c.b16 %v192, %v189
    %v238 = vpack.c.b16 %v193, %v190
    %v239 = vpack.c.b16 %v194, %v191
    %v240 = vpack.c.b16 %v198, %v195
    %v241 = vpack.c.b16 %v199, %v196
    %v242 = vpack.c.b16 %v200, %v197
    %v243 = vpack.c.b16 %v204, %v201
    %v244 = vpack.c.b16 %v205, %v202
    %v245 = vpack.c.b16 %v206, %v203
    %v246 = vpack.c.b16 %v210, %v207
    %v247 = vpack.c.b16 %v211, %v208
    %v248 = vpack.c.b16 %v212, %v209
    %v249 = vpack.c.b16 %v216, %v213
    %v250 = vpack.c.b16 %v217, %v214
    %v251 = vpack.c.b16 %v218, %v215
    %v252 = vpack.c.b16 %v222, %v219
    %v253 = vpack.c.b16 %v223, %v220
    %v254 = vpack.c.b16 %v224, %v221
    %v255 = vpack.c.b16 %v228, %v225
    %v256 = vpack.c.b16 %v229, %v226
    %v257 = vpack.c.b16 %v230, %v227
    %v258 = vpack.c.b16 %v234, %v231
    %v259 = vpack.c.b16 %v235, %v232
    %v260 = vpack.c.b16 %v236, %v233
    %285 = vmatprep.subr.bf16.mxu0 %v259
    %286 = vmatpush1.bf16.msra.mxu0 %v258
    %287 = vmatprep.subr.bf16.mxu0 %v256
    %288 = vmatpush1.bf16.msra.mxu0 %v255
    %289 = vmatprep.subr.bf16.mxu0 %v253
    %290 = vmatpush1.bf16.msra.mxu0 %v252
    %291 = vmatprep.subr.bf16.mxu0 %v250
    %292 = vmatpush1.bf16.msra.mxu0 %v249
    %293 = vmatprep.subr.bf16.mxu0 %v247
    %294 = vmatpush1.bf16.msra.mxu0 %v246
    %295 = vmatprep.subr.bf16.mxu0 %v244
    %296 = vmatpush1.bf16.msra.mxu0 %v243
    %297 = vmatprep.subr.bf16.mxu0 %v241
    %298 = vmatpush1.bf16.msra.mxu0 %v240
    %299 = vmatprep.subr.bf16.mxu0 %v238
    %300 = vmatpush1.bf16.msra.mxu0 %v237
    %301 = vmatprep.subr.bf16.mxu0 0
    %302 = vmatpush2.bf16.msra.mxu0 0
    %303 = vmatprep.subr.bf16.mxu0 0
    %304 = vmatpush2.bf16.msra.mxu0 0
    %305 = vmatprep.subr.bf16.mxu0 0
    %306 = vmatpush2.bf16.msra.mxu0 0
    %307 = vmatprep.subr.bf16.mxu0 0
    %308 = vmatpush2.bf16.msra.mxu0 0
    %309 = vmatprep.subr.bf16.mxu0 0
    %310 = vmatpush2.bf16.msra.mxu0 0
    %311 = vmatprep.subr.bf16.mxu0 0
    %312 = vmatpush2.bf16.msra.mxu0 0
    %313 = vmatprep.subr.bf16.mxu0 0
    %314 = vmatpush2.bf16.msra.mxu0 0
    %315 = vmatprep.subr.bf16.mxu0 0
    %316 = vmatpush2.bf16.msra.mxu0 0
    %317 = vmatprep.mubr.bf16.mxu0 0
    %318 = vmatmul.mubr.bf16.gmra.mxu0 %v124
    %v319 = vpop.f32.mrf.mxu0
    %v320 = vadd.f32 0.0, %v319
    %v321 = vpop.f32.mrf.mxu0
    %v322 = vadd.f32 0.0, %v321
    %v323 = vpop.f32.mrf.mxu0
    %v324 = vpop.f32.mrf.mxu0
    %325 = vdwg.mxu0
    %326 = vmatprep.subr.bf16.mxu0 0
    %327 = vmatpush1.bf16.msra.mxu0 %v260
    %328 = vmatprep.subr.bf16.mxu0 0
    %329 = vmatpush1.bf16.msra.mxu0 %v257
    %330 = vmatprep.subr.bf16.mxu0 0
    %331 = vmatpush1.bf16.msra.mxu0 %v254
    %332 = vmatprep.subr.bf16.mxu0 0
    %333 = vmatpush1.bf16.msra.mxu0 %v251
    %334 = vmatprep.subr.bf16.mxu0 0
    %335 = vmatpush1.bf16.msra.mxu0 %v248
    %336 = vmatprep.subr.bf16.mxu0 0
    %337 = vmatpush1.bf16.msra.mxu0 %v245
    %338 = vmatprep.subr.bf16.mxu0 0
    %339 = vmatpush1.bf16.msra.mxu0 %v242
    %340 = vmatprep.subr.bf16.mxu0 0
    %341 = vmatpush1.bf16.msra.mxu0 %v239
    %342 = vmatprep.subr.bf16.mxu0 0
    %343 = vmatpush2.bf16.msra.mxu0 0
    %344 = vmatprep.subr.bf16.mxu0 0
    %345 = vmatpush2.bf16.msra.mxu0 0
    %346 = vmatprep.subr.bf16.mxu0 0
    %347 = vmatpush2.bf16.msra.mxu0 0
    %348 = vmatprep.subr.bf16.mxu0 0
    %349 = vmatpush2.bf16.msra.mxu0 0
    %350 = vmatprep.subr.bf16.mxu0 0
    %351 = vmatpush2.bf16.msra.mxu0 0
    %352 = vmatprep.subr.bf16.mxu0 0
    %353 = vmatpush2.bf16.msra.mxu0 0
    %354 = vmatprep.subr.bf16.mxu0 0
    %355 = vmatpush2.bf16.msra.mxu0 0
    %356 = vmatprep.subr.bf16.mxu0 0
    %357 = vmatpush2.bf16.msra.mxu0 0
    %358 = vmatprep.mubr.bf16.mxu0 0
    %359 = vmatmul.mubr.bf16.gmra.mxu0 %v124
    %v360 = vpop.f32.mrf.mxu0
    %v361 = vadd.f32 0.0, %v360
    %v362 = vpop.f32.mrf.mxu0
    %v363 = vpop.f32.mrf.mxu0
    %v364 = vpop.f32.mrf.mxu0
    %365 = vdwg.mxu0
    %v366 = vld [vmem:[#allocation11] sm:$0x1]
    %v367 = vlaneseq
    %v368 = vshrl.u32 %v367, 7
    %v369 = vsub.s32 0, %v368
    %v370 = vrot.slane %v366, %v369
    %v371 = vadd.f32 %v320, %v370
    %v372 = vld [vmem:[#allocation11 + $0x1] sm:$0x1]
    %v373 = vlaneseq
    %v374 = vshrl.u32 %v373, 7
    %v375 = vsub.s32 0, %v374
    %v376 = vrot.slane %v372, %v375
    %v377 = vadd.f32 %v322, %v376
    %v378 = vld [vmem:[#allocation11 + $0x2] sm:$0x1]
    %v379 = vlaneseq
    %v380 = vshrl.u32 %v379, 7
    %v381 = vsub.s32 0, %v380
    %v382 = vrot.slane %v378, %v381
    %v383 = vadd.f32 %v361, %v382
    %v384 = vld [vmem:[%s1] sm:$0x1]
    %v386 = vlaneseq
    %v387 = vshrl.u32 %v386, 7
    %v388 = vsub.s32 0, %v387
    %v389 = vrot.slane %v384, %v388
    %391 = vmatprep.subr.mxu0 0.0
    %392 = vmatpush1.xpose.msra.mxu0 0.0
    %393 = vmatprep.subr.mxu0 0.0
    %394 = vmatpush1.xpose.msra.mxu0 0.0
    %395 = vmatprep.subr.mxu0 0.0
    %396 = vmatpush1.xpose.msra.mxu0 0.0
    %397 = vmatprep.subr.mxu0 0.0
    %398 = vmatpush1.xpose.msra.mxu0 0.0
    %399 = vmatprep.subr.mxu0 0.0
    %400 = vmatpush1.xpose.msra.mxu0 0.0
    %401 = vmatprep.subr.mxu0 0.0
    %402 = vmatpush1.xpose.msra.mxu0 0.0
    %403 = vmatprep.subr.mxu0 0.0
    %404 = vmatpush1.xpose.msra.mxu0 0.0
    %405 = vmatprep.subr.mxu0 0.0
    %406 = vmatpush1.xpose.msra.mxu0 0.0
    %407 = vmatprep.subr.mxu0 0.0
    %408 = vmatpush1.xpose.msra.mxu0 0.0
    %409 = vmatprep.subr.mxu0 0.0
    %410 = vmatpush1.xpose.msra.mxu0 0.0
    %411 = vmatprep.subr.mxu0 0.0
    %412 = vmatpush1.xpose.msra.mxu0 0.0
    %413 = vmatprep.subr.mxu0 0.0
    %414 = vmatpush1.xpose.msra.mxu0 0.0
    %415 = vmatprep.subr.mxu0 0.0
    %416 = vmatpush1.xpose.msra.mxu0 0.0
    %417 = vmatprep.subr.mxu0 0.0
    %418 = vmatpush1.xpose.msra.mxu0 0.0
    %419 = vmatprep.subr.mxu0 0.0
    %420 = vmatpush1.xpose.msra.mxu0 0.0
    %421 = vmatprep.subr.mxu0 0.0
    %422 = vmatpush1.xpose.msra.mxu0 %v377
    %423 = vmatprep.subr.mxu0 0.0
    %424 = vmatpush2.xpose.msra.mxu0 0.0
    %425 = vmatprep.subr.mxu0 0.0
    %426 = vmatpush2.xpose.msra.mxu0 0.0
    %427 = vmatprep.subr.mxu0 0.0
    %428 = vmatpush2.xpose.msra.mxu0 0.0
    %429 = vmatprep.subr.mxu0 0.0
    %430 = vmatpush2.xpose.msra.mxu0 0.0
    %431 = vmatprep.subr.mxu0 0.0
    %432 = vmatpush2.xpose.msra.mxu0 0.0
    %433 = vmatprep.subr.mxu0 0.0
    %434 = vmatpush2.xpose.msra.mxu0 0.0
    %435 = vmatprep.subr.mxu0 0.0
    %436 = vmatpush2.xpose.msra.mxu0 0.0
    %437 = vmatprep.subr.mxu0 0.0
    %438 = vmatpush2.xpose.msra.mxu0 0.0
    %439 = vmatprep.subr.mxu0 0.0
    %440 = vmatpush2.xpose.msra.mxu0 0.0
    %441 = vmatprep.subr.mxu0 0.0
    %442 = vmatpush2.xpose.msra.mxu0 0.0
    %443 = vmatprep.subr.mxu0 0.0
    %444 = vmatpush2.xpose.msra.mxu0 0.0
    %445 = vmatprep.subr.mxu0 0.0
    %446 = vmatpush2.xpose.msra.mxu0 0.0
    %447 = vmatprep.subr.mxu0 0.0
    %448 = vmatpush2.xpose.msra.mxu0 0.0
    %449 = vmatprep.subr.mxu0 0.0
    %450 = vmatpush2.xpose.msra.mxu0 0.0
    %451 = vmatprep.subr.mxu0 0.0
    %452 = vmatpush2.xpose.msra.mxu0 0.0
    %453 = vmatprep.subr.mxu0 0.0
    %454 = vmatpush2.xpose.msra.mxu0 0.0
    %455 = vmatprep.mubr.f32.mxu0 0.0
    %456 = vmatmul.mubr.f32.gmra.mxu0 %v371
    %v457 = vpop.f32.mrf.mxu0
    %v458 = vadd.f32 %v389, %v457
    %v459 = vpop.f32.mrf.mxu0
    %460 = vdwg.mxu0
    %vm461 = vcmask 64512
    %v462 = vsel %vm461, %v458, -inf
    %463 = vmax.xlane.f32.xlu0 %v462
    %v464 = vpop.xlane.xlu0 %463
    %v465 = vsub.f32 %v458, %v464
    %v466 = vmul.f32 %v465, 1.442695
    %v467 = vpow.pop %v466
    %v468 = vsel %vm461, %v467, 0.0
    %469 = vadd.xlane.f32.xlu0 %v468
    %v470 = vpop.xlane.xlu0 %469
    %v471 = vrcp.pop %v470
    %v472 = vmul.f32 %v467, %v471
    %v474 = vsel %vm461, %v472, 0
    %476 = vmatprep.subr.mxu0 0.0
    %477 = vmatpush1.msra.mxu0 0.0
    %478 = vmatprep.subr.mxu0 0.0
    %479 = vmatpush1.msra.mxu0 0.0
    %480 = vmatprep.subr.mxu0 0.0
    %481 = vmatpush1.msra.mxu0 0.0
    %482 = vmatprep.subr.mxu0 0.0
    %483 = vmatpush1.msra.mxu0 0.0
    %484 = vmatprep.subr.mxu0 0.0
    %485 = vmatpush1.msra.mxu0 0.0
    %486 = vmatprep.subr.mxu0 0.0
    %487 = vmatpush1.msra.mxu0 0.0
    %488 = vmatprep.subr.mxu0 0.0
    %489 = vmatpush1.msra.mxu0 0.0
    %490 = vmatprep.subr.mxu0 0.0
    %491 = vmatpush1.msra.mxu0 0.0
    %492 = vmatprep.subr.mxu0 0.0
    %493 = vmatpush1.msra.mxu0 0.0
    %494 = vmatprep.subr.mxu0 0.0
    %495 = vmatpush1.msra.mxu0 0.0
    %496 = vmatprep.subr.mxu0 0.0
    %497 = vmatpush1.msra.mxu0 0.0
    %498 = vmatprep.subr.mxu0 0.0
    %499 = vmatpush1.msra.mxu0 0.0
    %500 = vmatprep.subr.mxu0 0.0
    %501 = vmatpush1.msra.mxu0 0.0
    %502 = vmatprep.subr.mxu0 0.0
    %503 = vmatpush1.msra.mxu0 0.0
    %504 = vmatprep.subr.mxu0 0.0
    %505 = vmatpush1.msra.mxu0 0.0
    %506 = vmatprep.subr.mxu0 0.0
    %507 = vmatpush1.msra.mxu0 %v383
    %508 = vmatprep.subr.mxu0 0.0
    %509 = vmatpush2.msra.mxu0 0.0
    %510 = vmatprep.subr.mxu0 0.0
    %511 = vmatpush2.msra.mxu0 0.0
    %512 = vmatprep.subr.mxu0 0.0
    %513 = vmatpush2.msra.mxu0 0.0
    %514 = vmatprep.subr.mxu0 0.0
    %515 = vmatpush2.msra.mxu0 0.0
    %516 = vmatprep.subr.mxu0 0.0
    %517 = vmatpush2.msra.mxu0 0.0
    %518 = vmatprep.subr.mxu0 0.0
    %519 = vmatpush2.msra.mxu0 0.0
    %520 = vmatprep.subr.mxu0 0.0
    %521 = vmatpush2.msra.mxu0 0.0
    %522 = vmatprep.subr.mxu0 0.0
    %523 = vmatpush2.msra.mxu0 0.0
    %524 = vmatprep.subr.mxu0 0.0
    %525 = vmatpush2.msra.mxu0 0.0
    %526 = vmatprep.subr.mxu0 0.0
    %527 = vmatpush2.msra.mxu0 0.0
    %528 = vmatprep.subr.mxu0 0.0
    %529 = vmatpush2.msra.mxu0 0.0
    %530 = vmatprep.subr.mxu0 0.0
    %531 = vmatpush2.msra.mxu0 0.0
    %532 = vmatprep.subr.mxu0 0.0
    %533 = vmatpush2.msra.mxu0 0.0
    %534 = vmatprep.subr.mxu0 0.0
    %535 = vmatpush2.msra.mxu0 0.0
    %536 = vmatprep.subr.mxu0 0.0
    %537 = vmatpush2.msra.mxu0 0.0
    %538 = vmatprep.subr.mxu0 0.0
    %539 = vmatpush2.msra.mxu0 0.0
    %540 = vmatprep.mubr.f32.mxu0 0.0
    %541 = vmatmul.mubr.f32.gmra.mxu0 %v474
    %v542 = vpop.f32.mrf.mxu0
    %v543 = vadd.f32 0.0, %v542
    %v544 = vpop.f32.mrf.mxu0
    %545 = vdwg.mxu0
    %v546 = vpack.c.bf16 %v543, %v543
    %v547 = vld [vmem:[#allocation10 + $0xc] sm:$0xf]
    %v548 = vld [vmem:[#allocation10 + $0x24] sm:$0xf]
    %v549 = vld [vmem:[#allocation10 + $0x3c] sm:$0xf]
    %v550 = vld [vmem:[#allocation10 + $0x54] sm:$0xf]
    %v551 = vld [vmem:[#allocation10 + $0x6c] sm:$0xf]
    %v552 = vld [vmem:[#allocation10 + $0x84] sm:$0xf]
    %v553 = vld [vmem:[#allocation10 + $0x9c] sm:$0xf]
    %v554 = vld [vmem:[#allocation10 + $0xb4] sm:$0xf]
    %v555 = vld [vmem:[#allocation10 + $0xcc] sm:$0xf]
    %v556 = vld [vmem:[#allocation10 + $0xe4] sm:$0xf]
    %v557 = vld [vmem:[#allocation10 + $0xfc] sm:$0xf]
    %v558 = vld [vmem:[#allocation10 + $0x114] sm:$0xf]
    %v559 = vld [vmem:[#allocation10 + $0x12c] sm:$0xf]
    %v560 = vld [vmem:[#allocation10 + $0x144] sm:$0xf]
    %v561 = vld [vmem:[#allocation10 + $0x15c] sm:$0xf]
    %v562 = vld [vmem:[#allocation10 + $0x174] sm:$0xf]
    %v563 = vld [vmem:[#allocation11 + $0x3] sm:$0x1]
    %v564 = vlaneseq
    %v565 = vshrl.u32 %v564, 7
    %v566 = vsub.s32 0, %v565
    %v567 = vrot.slane %v563, %v566
    %v584 = vunpack.c.l.b16 %v547
    %v585 = vunpack.c.l.b16 %v548
    %v586 = vunpack.c.l.b16 %v549
    %v587 = vunpack.c.l.b16 %v550
    %v588 = vunpack.c.l.b16 %v551
    %v589 = vunpack.c.l.b16 %v552
    %v590 = vunpack.c.l.b16 %v553
    %v591 = vunpack.c.l.b16 %v554
    %v592 = vunpack.c.l.b16 %v555
    %v593 = vunpack.c.l.b16 %v556
    %v594 = vunpack.c.l.b16 %v557
    %v595 = vunpack.c.l.b16 %v558
    %v596 = vunpack.c.l.b16 %v559
    %v597 = vunpack.c.l.b16 %v560
    %v598 = vunpack.c.l.b16 %v561
    %v599 = vunpack.c.l.b16 %v562
    %v600 = vpack.c.b16 %v585, %v584
    %v601 = vpack.c.b16 %v587, %v586
    %v602 = vpack.c.b16 %v589, %v588
    %v603 = vpack.c.b16 %v591, %v590
    %v604 = vpack.c.b16 %v593, %v592
    %v605 = vpack.c.b16 %v595, %v594
    %v606 = vpack.c.b16 %v597, %v596
    %v607 = vpack.c.b16 %v599, %v598
    %616 = vmatprep.subr.bf16.mxu0 0
    %617 = vmatpush1.bf16.msra.mxu0 %v607
    %618 = vmatprep.subr.bf16.mxu0 0
    %619 = vmatpush1.bf16.msra.mxu0 %v606
    %620 = vmatprep.subr.bf16.mxu0 0
    %621 = vmatpush1.bf16.msra.mxu0 %v605
    %622 = vmatprep.subr.bf16.mxu0 0
    %623 = vmatpush1.bf16.msra.mxu0 %v604
    %624 = vmatprep.subr.bf16.mxu0 0
    %625 = vmatpush1.bf16.msra.mxu0 %v603
    %626 = vmatprep.subr.bf16.mxu0 0
    %627 = vmatpush1.bf16.msra.mxu0 %v602
    %628 = vmatprep.subr.bf16.mxu0 0
    %629 = vmatpush1.bf16.msra.mxu0 %v601
    %630 = vmatprep.subr.bf16.mxu0 0
    %631 = vmatpush1.bf16.msra.mxu0 %v600
    %632 = vmatprep.subr.bf16.mxu0 0
    %633 = vmatpush2.bf16.msra.mxu0 0
    %634 = vmatprep.subr.bf16.mxu0 0
    %635 = vmatpush2.bf16.msra.mxu0 0
    %636 = vmatprep.subr.bf16.mxu0 0
    %637 = vmatpush2.bf16.msra.mxu0 0
    %638 = vmatprep.subr.bf16.mxu0 0
    %639 = vmatpush2.bf16.msra.mxu0 0
    %640 = vmatprep.subr.bf16.mxu0 0
    %641 = vmatpush2.bf16.msra.mxu0 0
    %642 = vmatprep.subr.bf16.mxu0 0
    %643 = vmatpush2.bf16.msra.mxu0 0
    %644 = vmatprep.subr.bf16.mxu0 0
    %645 = vmatpush2.bf16.msra.mxu0 0
    %646 = vmatprep.subr.bf16.mxu0 0
    %647 = vmatpush2.bf16.msra.mxu0 0
    %648 = vmatprep.mubr.bf16.mxu0 0
    %649 = vmatmul.mubr.bf16.gmra.mxu0 %v546
    %v650 = vpop.f32.mrf.mxu0
    %v651 = vadd.f32 %v567, %v650
    %v652 = vpop.f32.mrf.mxu0
    %v653 = vpop.f32.mrf.mxu0
    %v654 = vpop.f32.mrf.mxu0
    %655 = vdwg.mxu0
    %v656 = vadd.f32 %v122, %v651
    %v657 = vld [vmem:[#allocation11 + $0x6] sm:$0x1]
    %v658 = vld [vmem:[#allocation11 + $0x7] sm:$0x1]
    %659 = vadd.xlane.f32.xlu0 %v656
    %v660 = vpop.xlane.xlu0 %659
    %v661 = vmul.f32 %v660, 0.03125
    %v662 = vsub.f32 %v656, %v661
    %v663 = vlaneseq
    %v664 = vshrl.u32 %v663, 7
    %v665 = vsub.s32 0, %v664
    %v666 = vrot.slane %v123, %v665
    %v667 = vmul.f32 %v662, %v666
    %v668 = vmul.f32 %v667, %v667
    %669 = vadd.xlane.f32.xlu0 %v668
    %v670 = vpop.xlane.xlu0 %669
    %v671 = vmul.f32 %v670, 0.03125
    %v672 = vadd.f32 %v671, 1e-12
    %v673 = vrsqrt.pop %v672
    %v674 = vmul.f32 %v667, %v673
    %v675 = vlaneseq
    %v676 = vshrl.u32 %v675, 7
    %v677 = vsub.s32 0, %v676
    %v678 = vrot.slane %v657, %v677
    %v679 = vmul.f32 %v674, %v678
    %v680 = vlaneseq
    %v681 = vshrl.u32 %v680, 7
    %v682 = vsub.s32 0, %v681
    %v683 = vrot.slane %v658, %v682
    %v684 = vadd.f32 %v679, %v683
    %v685 = vpack.c.bf16 %v684, %v684
    %v686 = vld [vmem:[#allocation10 + $0x10] sm:$0xf]
    %v687 = vld [vmem:[#allocation10 + $0x28] sm:$0xf]
    %v688 = vld [vmem:[#allocation10 + $0x40] sm:$0xf]
    %v689 = vld [vmem:[#allocation10 + $0x58] sm:$0xf]
    %v690 = vld [vmem:[#allocation10 + $0x70] sm:$0xf]
    %v691 = vld [vmem:[#allocation10 + $0x88] sm:$0xf]
    %v692 = vld [vmem:[#allocation10 + $0xa0] sm:$0xf]
    %v693 = vld [vmem:[#allocation10 + $0xb8] sm:$0xf]
    %v694 = vld [vmem:[#allocation10 + $0xd0] sm:$0xf]
    %v695 = vld [vmem:[#allocation10 + $0xe8] sm:$0xf]
    %v696 = vld [vmem:[#allocation10 + $0x100] sm:$0xf]
    %v697 = vld [vmem:[#allocation10 + $0x118] sm:$0xf]
    %v698 = vld [vmem:[#allocation10 + $0x130] sm:$0xf]
    %v699 = vld [vmem:[#allocation10 + $0x148] sm:$0xf]
    %v700 = vld [vmem:[#allocation10 + $0x160] sm:$0xf]
    %v701 = vld [vmem:[#allocation10 + $0x178] sm:$0xf]
    %v702 = vld [vmem:[#allocation11 + $0x4] sm:$0x1]
    %v703 = vlaneseq
    %v704 = vshrl.u32 %v703, 7
    %v705 = vsub.s32 0, %v704
    %v706 = vrot.slane %v702, %v705
    %v723 = vunpack.c.l.b16 %v686
    %v724 = vunpack.c.l.b16 %v687
    %v725 = vunpack.c.l.b16 %v688
    %v726 = vunpack.c.l.b16 %v689
    %v727 = vunpack.c.l.b16 %v690
    %v728 = vunpack.c.l.b16 %v691
    %v729 = vunpack.c.l.b16 %v692
    %v730 = vunpack.c.l.b16 %v693
    %v731 = vunpack.c.l.b16 %v694
    %v732 = vunpack.c.l.b16 %v695
    %v733 = vunpack.c.l.b16 %v696
    %v734 = vunpack.c.l.b16 %v697
    %v735 = vunpack.c.l.b16 %v698
    %v736 = vunpack.c.l.b16 %v699
    %v737 = vunpack.c.l.b16 %v700
    %v738 = vunpack.c.l.b16 %v701
    %v739 = vpack.c.b16 %v724, %v723
    %v740 = vpack.c.b16 %v726, %v725
    %v741 = vpack.c.b16 %v728, %v727
    %v742 = vpack.c.b16 %v730, %v729
    %v743 = vpack.c.b16 %v732, %v731
    %v744 = vpack.c.b16 %v734, %v733
    %v745 = vpack.c.b16 %v736, %v735
    %v746 = vpack.c.b16 %v738, %v737
    %755 = vmatprep.subr.bf16.mxu0 0
    %756 = vmatpush1.bf16.msra.mxu0 %v746
    %757 = vmatprep.subr.bf16.mxu0 0
    %758 = vmatpush1.bf16.msra.mxu0 %v745
    %759 = vmatprep.subr.bf16.mxu0 0
    %760 = vmatpush1.bf16.msra.mxu0 %v744
    %761 = vmatprep.subr.bf16.mxu0 0
    %762 = vmatpush1.bf16.msra.mxu0 %v743
    %763 = vmatprep.subr.bf16.mxu0 0
    %764 = vmatpush1.bf16.msra.mxu0 %v742
    %765 = vmatprep.subr.bf16.mxu0 0
    %766 = vmatpush1.bf16.msra.mxu0 %v741
    %767 = vmatprep.subr.bf16.mxu0 0
    %768 = vmatpush1.bf16.msra.mxu0 %v740
    %769 = vmatprep.subr.bf16.mxu0 0
    %770 = vmatpush1.bf16.msra.mxu0 %v739
    %771 = vmatprep.subr.bf16.mxu0 0
    %772 = vmatpush2.bf16.msra.mxu0 0
    %773 = vmatprep.subr.bf16.mxu0 0
    %774 = vmatpush2.bf16.msra.mxu0 0
    %775 = vmatprep.subr.bf16.mxu0 0
    %776 = vmatpush2.bf16.msra.mxu0 0
    %777 = vmatprep.subr.bf16.mxu0 0
    %778 = vmatpush2.bf16.msra.mxu0 0
    %779 = vmatprep.subr.bf16.mxu0 0
    %780 = vmatpush2.bf16.msra.mxu0 0
    %781 = vmatprep.subr.bf16.mxu0 0
    %782 = vmatpush2.bf16.msra.mxu0 0
    %783 = vmatprep.subr.bf16.mxu0 0
    %784 = vmatpush2.bf16.msra.mxu0 0
    %785 = vmatprep.subr.bf16.mxu0 0
    %786 = vmatpush2.bf16.msra.mxu0 0
    %787 = vmatprep.mubr.bf16.mxu0 0
    %788 = vmatmul.mubr.bf16.gmra.mxu0 %v685
    %v789 = vpop.f32.mrf.mxu0
    %v790 = vadd.f32 %v706, %v789
    %v791 = vpop.f32.mrf.mxu0
    %v792 = vpop.f32.mrf.mxu0
    %v793 = vpop.f32.mrf.mxu0
    %794 = vdwg.mxu0
    %v795 = vmul.f32 %v790, 0.5
    %v796 = vmul.f32 %v790, 0.044715
    %v797 = vmul.f32 %v796, %v790
    %v798 = vmul.f32 %v797, %v790
    %v799 = vadd.f32 %v790, %v798
    %v800 = vmul.f32 %v799, 0.7978846
    %v801 = vtanh.pop %v800
    %v802 = vadd.f32 %v801, 1.0
    %v803 = vmul.f32 %v795, %v802
    %v804 = vpack.c.bf16 %v803, %v803
    %v805 = vld [vmem:[#allocation10 + $0x14] sm:$0xf]
    %v806 = vld [vmem:[#allocation10 + $0x2c] sm:$0xf]
    %v807 = vld [vmem:[#allocation10 + $0x44] sm:$0xf]
    %v808 = vld [vmem:[#allocation10 + $0x5c] sm:$0xf]
    %v809 = vld [vmem:[#allocation10 + $0x74] sm:$0xf]
    %v810 = vld [vmem:[#allocation10 + $0x8c] sm:$0xf]
    %v811 = vld [vmem:[#allocation10 + $0xa4] sm:$0xf]
    %v812 = vld [vmem:[#allocation10 + $0xbc] sm:$0xf]
    %v813 = vld [vmem:[#allocation10 + $0xd4] sm:$0xf]
    %v814 = vld [vmem:[#allocation10 + $0xec] sm:$0xf]
    %v815 = vld [vmem:[#allocation10 + $0x104] sm:$0xf]
    %v816 = vld [vmem:[#allocation10 + $0x11c] sm:$0xf]
    %v817 = vld [vmem:[#allocation10 + $0x134] sm:$0xf]
    %v818 = vld [vmem:[#allocation10 + $0x14c] sm:$0xf]
    %v819 = vld [vmem:[#allocation10 + $0x164] sm:$0xf]
    %v820 = vld [vmem:[#allocation10 + $0x17c] sm:$0xf]
    %v821 = vld [vmem:[#allocation11 + $0x5] sm:$0x1]
    %v822 = vlaneseq
    %v823 = vshrl.u32 %v822, 7
    %v824 = vsub.s32 0, %v823
    %v825 = vrot.slane %v821, %v824
    %v842 = vunpack.c.l.b16 %v805
    %v843 = vunpack.c.l.b16 %v806
    %v844 = vunpack.c.l.b16 %v807
    %v845 = vunpack.c.l.b16 %v808
    %v846 = vunpack.c.l.b16 %v809
    %v847 = vunpack.c.l.b16 %v810
    %v848 = vunpack.c.l.b16 %v811
    %v849 = vunpack.c.l.b16 %v812
    %v850 = vunpack.c.l.b16 %v813
    %v851 = vunpack.c.l.b16 %v814
    %v852 = vunpack.c.l.b16 %v815
    %v853 = vunpack.c.l.b16 %v816
    %v854 = vunpack.c.l.b16 %v817
    %v855 = vunpack.c.l.b16 %v818
    %v856 = vunpack.c.l.b16 %v819
    %v857 = vunpack.c.l.b16 %v820
    %v858 = vpack.c.b16 %v843, %v842
    %v859 = vpack.c.b16 %v845, %v844
    %v860 = vpack.c.b16 %v847, %v846
    %v861 = vpack.c.b16 %v849, %v848
    %v862 = vpack.c.b16 %v851, %v850
    %v863 = vpack.c.b16 %v853, %v852
    %v864 = vpack.c.b16 %v855, %v854
    %v865 = vpack.c.b16 %v857, %v856
    %874 = vmatprep.subr.bf16.mxu0 0
    %875 = vmatpush1.bf16.msra.mxu0 %v865
    %876 = vmatprep.subr.bf16.mxu0 0
    %877 = vmatpush1.bf16.msra.mxu0 %v864
    %878 = vmatprep.subr.bf16.mxu0 0
    %879 = vmatpush1.bf16.msra.mxu0 %v863
    %880 = vmatprep.subr.bf16.mxu0 0
    %881 = vmatpush1.bf16.msra.mxu0 %v862
    %882 = vmatprep.subr.bf16.mxu0 0
    %883 = vmatpush1.bf16.msra.mxu0 %v861
    %884 = vmatprep.subr.bf16.mxu0 0
    %885 = vmatpush1.bf16.msra.mxu0 %v860
    %886 = vmatprep.subr.bf16.mxu0 0
    %887 = vmatpush1.bf16.msra.mxu0 %v859
    %888 = vmatprep.subr.bf16.mxu0 0
    %889 = vmatpush1.bf16.msra.mxu0 %v858
    %890 = vmatprep.subr.bf16.mxu0 0
    %891 = vmatpush2.bf16.msra.mxu0 0
    %892 = vmatprep.subr.bf16.mxu0 0
    %893 = vmatpush2.bf16.msra.mxu0 0
    %894 = vmatprep.subr.bf16.mxu0 0
    %895 = vmatpush2.bf16.msra.mxu0 0
    %896 = vmatprep.subr.bf16.mxu0 0
    %897 = vmatpush2.bf16.msra.mxu0 0
    %898 = vmatprep.subr.bf16.mxu0 0
    %899 = vmatpush2.bf16.msra.mxu0 0
    %900 = vmatprep.subr.bf16.mxu0 0
    %901 = vmatpush2.bf16.msra.mxu0 0
    %902 = vmatprep.subr.bf16.mxu0 0
    %903 = vmatpush2.bf16.msra.mxu0 0
    %904 = vmatprep.subr.bf16.mxu0 0
    %905 = vmatpush2.bf16.msra.mxu0 0
    %906 = vmatprep.mubr.bf16.mxu0 0
    %907 = vmatmul.mubr.bf16.gmra.mxu0 %v804
    %v908 = vpop.f32.mrf.mxu0
    %v909 = vadd.f32 %v825, %v908
    %v910 = vpop.f32.mrf.mxu0
    %v911 = vpop.f32.mrf.mxu0
    %v912 = vpop.f32.mrf.mxu0
    %913 = vdwg.mxu0
    %v914 = vadd.f32 %v684, %v909
    %v915 = vld [vmem:[#allocation11 + $0x8] sm:$0x1]
    %v916 = vld [vmem:[#allocation11 + $0x9] sm:$0x1]
    %917 = vadd.xlane.f32.xlu0 %v914
    %v918 = vpop.xlane.xlu0 %917
    %v919 = vmul.f32 %v918, 0.03125
    %v920 = vsub.f32 %v914, %v919
    %v921 = vmul.f32 %v920, %v666
    %v922 = vmul.f32 %v921, %v921
    %923 = vadd.xlane.f32.xlu0 %v922
    %v924 = vpop.xlane.xlu0 %923
    %v925 = vmul.f32 %v924, 0.03125
    %v926 = vadd.f32 %v925, 1e-12
    %v927 = vrsqrt.pop %v926
    %v928 = vmul.f32 %v921, %v927
    %v929 = vlaneseq
    %v930 = vshrl.u32 %v929, 7
    %v931 = vsub.s32 0, %v930
    %v932 = vrot.slane %v915, %v931
    %v933 = vmul.f32 %v928, %v932
    %v934 = vlaneseq
    %v935 = vshrl.u32 %v934, 7
    %v936 = vsub.s32 0, %v935
    %v937 = vrot.slane %v916, %v936
    %v938 = vadd.f32 %v933, %v937
    %939 = vst [vmem:[#allocation13] sm:$0xff] %v938
    // Predicated region
    $region38: #{_encode_batch.1} parent=1 // pred_check
      _
    $region39: #{_encode_batch.1} parent=1 // pred_check_branch
      %941 = sbr.rel (0) target = $region41
    $region40: #{_encode_batch.1} parent=1 // pred_region
      %s943 = ssub.s32 128, 128
      %944 = vsyncadd [#allocation7], %s943
      %s946 = sshll.u32 [#allocation13], 4
      %s947 = int_to_ptr.vmem [resolvable:$true] %s946
      %949 = dma.vmem_to_hbm [thread:$0]  %s947, 128, %s6, [#allocation7]
    $region41: #{_encode_batch.1} parent=1 // pred_fallthru
      _
    // Predicated region
    $region42: #{_encode_batch.1} parent=1 // pred_check
      _
    $region43: #{_encode_batch.1} parent=1 // pred_check_branch
      %951 = sbr.rel (0) target = $region45
    $region44: #{_encode_batch.1} parent=1 // pred_region
      %952 = dma.done [#allocation7], 128
    $region45: #{_encode_batch.1} parent=1 // pred_fallthru
      _
    %953 = vsyncpa [#allocation6], 1
    %954 = vsyncpa [#allocation9], 1
    %955 = vsyncpa [#allocation12], 1
    %956 = vsyncpa [#allocation7], 1

</llo_original>
